<compile_context>
chip_gen: v5e
topology: v5e:2x2
jax: 0.10.0
libtpu: 0.0.40
codegen_flags: <defaults>
</compile_context>

<pallas_src>
import jax
import jax.numpy as jnp
from jax import lax
from jax.experimental import pallas as pl
from jax.experimental.pallas import tpu as pltpu

INPUT_SIZE = 784
NUM_CLASSES = 10
MAX_TILE_B = 1024  # f32 rows; safe double-buffered on v5e/v6e/v7x default scoped VMEM


def _round_up(x, m):
    return ((x + m - 1) // m) * m


def linear_kernel(x_ref, w_ref, b_ref, o_ref):
    # x_ref: (TILE_B, INPUT_SIZE)
    # w_ref: (NUM_CLASSES, INPUT_SIZE)  -- natural nn.Linear layout
    # b_ref: (1, NUM_CLASSES)
    x = x_ref[...]
    w = w_ref[...]
    b = b_ref[...]
    # Contract x's dim 1 with w's dim 1  ==  x @ w.T, accumulate in f32 on the MXU.
    acc = lax.dot_general(
        x, w,
        dimension_numbers=(((1,), (1,)), ((), ())),
        preferred_element_type=jnp.float32,
    )
    o_ref[...] = (acc + b).astype(o_ref.dtype)


def logistic_regression_forward(x, weight, bias):
    """x: (B, input_size) f32; weight: (num_classes, input_size); bias: (num_classes,)."""
    B, K = x.shape
    N = weight.shape[0]

    # Tile size: multiple of 8 sublanes, capped so double-buffered x fits scoped VMEM.
    tile_b = min(MAX_TILE_B, _round_up(B, 8))
    b_pad = _round_up(B, tile_b)
    if b_pad != B:
        x = jnp.pad(x, ((0, b_pad - B), (0, 0)))

    b2 = bias.reshape(1, N)
    grid = (b_pad // tile_b,)

    out = pl.pallas_call(
        linear_kernel,
        out_shape=jax.ShapeDtypeStruct((b_pad, N), x.dtype),
        grid_spec=pltpu.PrefetchScalarGridSpec(
            num_scalar_prefetch=0,
            grid=grid,
            in_specs=[
                # x: one batch tile per grid step -> double-buffered DMA overlaps compute
                pl.BlockSpec((tile_b, K), lambda i: (i, 0)),
                # weight / bias: constant index map -> stays resident in VMEM
                pl.BlockSpec((N, K), lambda i: (0, 0)),
                pl.BlockSpec((1, N), lambda i: (0, 0)),
            ],
            out_specs=pl.BlockSpec((tile_b, N), lambda i: (i, 0)),
        ),
        compiler_params=pltpu.CompilerParams(
            # Independent batch tiles: lets megacore (v7x 2 TCs) split the grid.
            dimension_semantics=("parallel",),
        ),
        cost_estimate=pl.CostEstimate(
            flops=2 * b_pad * K * N,
            bytes_accessed=b_pad * K * 4 + N * K * 4 + N * 4 + b_pad * N * 4,
            transcendentals=0,
        ),
    )(x, weight, b2)

    return out[:B] if b_pad != B else out


if __name__ == "__main__":
    key = jax.random.PRNGKey(0)
    kx, kw, kb = jax.random.split(key, 3)

    batch = 8
    x = jax.random.normal(kx, (batch, INPUT_SIZE), dtype=jnp.float32)

    # Deterministic init mimicking nn.Linear default (uniform in +/- 1/sqrt(fan_in))
    bound = 1.0 / (INPUT_SIZE ** 0.5)
    weight = jax.random.uniform(kw, (NUM_CLASSES, INPUT_SIZE),
                                minval=-bound, maxval=bound, dtype=jnp.float32)
    bias = jax.random.uniform(kb, (NUM_CLASSES,),
                              minval=-bound, maxval=bound, dtype=jnp.float32)

    out = logistic_regression_forward(x, weight, bias)
    jax.block_until_ready(out)

    # Correctness check against plain JAX reference
    ref = x @ weight.T + bias
    assert out.shape == (batch, NUM_CLASSES)
    assert jnp.allclose(out, ref, atol=1e-4, rtol=1e-4)

    print("KERNEL_OK")
</pallas_src>

<mosaic_0001>
module attributes {stable_mosaic.version = 11 : i64} {
  func.func @linear_kernel(%arg0: i32, %arg1: memref<8x784xf32, #tpu.memory_space<vmem>>, %arg2: memref<10x784xf32, #tpu.memory_space<vmem>>, %arg3: memref<1x10xf32, #tpu.memory_space<vmem>>, %arg4: memref<8x10xf32, #tpu.memory_space<vmem>>) attributes {dimension_semantics = [#tpu.dimension_semantics<parallel>], iteration_bounds = array<i64: 1>, scalar_prefetch = 0 : i64, scratch_operands = 0 : i64, tpu.core_type = #tpu.core_type<tc>, window_params = [{transform_indices = @transform_0, window_bounds = array<i64: 8, 784>}, {pipeline_mode = #tpu.pipeline_mode<synchronous>, transform_indices = @transform_1, window_bounds = array<i64: 10, 784>}, {pipeline_mode = #tpu.pipeline_mode<synchronous>, transform_indices = @transform_2, window_bounds = array<i64: 1, 10>}, {transform_indices = @transform_3, window_bounds = array<i64: 8, 10>}]} {
    %c0 = arith.constant 0 : index
    %c0_0 = arith.constant 0 : index
    %0 = vector.load %arg1[%c0, %c0_0] : memref<8x784xf32, #tpu.memory_space<vmem>>, vector<8x784xf32>
    %c0_1 = arith.constant 0 : index
    %c0_2 = arith.constant 0 : index
    %1 = vector.load %arg2[%c0_1, %c0_2] : memref<10x784xf32, #tpu.memory_space<vmem>>, vector<10x784xf32>
    %c0_3 = arith.constant 0 : index
    %c0_4 = arith.constant 0 : index
    %2 = vector.load %arg3[%c0_3, %c0_4] : memref<1x10xf32, #tpu.memory_space<vmem>>, vector<1x10xf32>
    %cst = arith.constant dense<0.000000e+00> : vector<8x10xf32>
    %3 = tpu.matmul %0, %1, %cst {dimension_numbers = #tpu.dot_dimension_numbers<[1], [1], [0], [0], [0, 0, 1, 0], [], []>} : vector<8x784xf32>, vector<10x784xf32>, vector<8x10xf32> -> vector<8x10xf32>
    %4 = vector.broadcast %2 : vector<1x10xf32> to vector<8x10xf32>
    %5 = arith.addf %3, %4 : vector<8x10xf32>
    %c0_5 = arith.constant 0 : index
    %c0_6 = arith.constant 0 : index
    %6 = vector.load %arg4[%c0_5, %c0_6] : memref<8x10xf32, #tpu.memory_space<vmem>>, vector<8x10xf32>
    tpu.vector_store %arg4[%c0_5, %c0_6], %5 {strides = array<i32>} : memref<8x10xf32, #tpu.memory_space<vmem>>, vector<8x10xf32>,
    return
  }
  func.func @transform_0(%arg0: i32) -> (i32, i32) {
    %c0_i32 = arith.constant 0 : i32
    %c0_i32_0 = arith.constant 0 : i32
    return %arg0, %c0_i32 : i32, i32
  }
  func.func @transform_1(%arg0: i32) -> (i32, i32) {
    %c0_i32 = arith.constant 0 : i32
    %c0_i32_0 = arith.constant 0 : i32
    %c0_i32_1 = arith.constant 0 : i32
    return %c0_i32, %c0_i32_0 : i32, i32
  }
  func.func @transform_2(%arg0: i32) -> (i32, i32) {
    %c0_i32 = arith.constant 0 : i32
    %c0_i32_0 = arith.constant 0 : i32
    %c0_i32_1 = arith.constant 0 : i32
    return %c0_i32, %c0_i32_0 : i32, i32
  }
  func.func @transform_3(%arg0: i32) -> (i32, i32) {
    %c0_i32 = arith.constant 0 : i32
    %c0_i32_0 = arith.constant 0 : i32
    return %arg0, %c0_i32 : i32, i32
  }
}

</mosaic_0001>

<llo_original>
// kernel: tpu_custom_call.1
$region0: #{tpu_custom_call.1}
  #allocation0 [shape = 'u32[]', space=smem, size = 0x4, offset = 0x4, fixed_abs, tag = 'smem constant byte address 0x4 - core index']
  #allocation1 [shape = 'u32[72,128]{1,0:T(1,128)}', space=vmem, size = 0x9000, scoped, tag = 'internal scratch']
  %s0 = inlined_call_operand.hbm [shape: f32[8,784], index: 0, kind: input, shape index: {}]
  %s1 = inlined_call_operand.hbm [shape: f32[10,784], index: 1, kind: input, shape index: {}]
  %s2 = inlined_call_operand.vmem [shape: f32[1,10], index: 2, kind: input, shape index: {}]
  %s3 = inlined_call_operand.hbm [shape: f32[8,10], index: 3, kind: output, shape index: {}]
  %s4 = sld [smem:[#allocation0]]
  $region30: #{tpu_custom_call.1} parent=0
    _
  %s6 = ssub.s32 1, %s4
  %s7 = scalar_select 0, %s6, %s4
  $region1: #{tpu_custom_call.1} parent=0
    #allocation2 [shape = 'u8[28672]{0}', space=vmem, size = 0x7000, scoped, tag = 'input window, operand 0, single buffered']
    #allocation3 [shape = 's32[1]{0}', space=sflag, size = 0x4, scoped, tag = 'scoped memory for tpu_custom_call.1']
    #allocation4 [shape = 's32[1]{0}', space=sflag, size = 0x4, scoped, tag = 'scoped memory for tpu_custom_call.1']
    #allocation5 [shape = 'u8[57344]{0}', space=vmem, size = 0xe000, scoped, tag = 'input window, operand 1, single buffered']
    #allocation6 [shape = 's32[1]{0}', space=sflag, size = 0x4, scoped, tag = 'scoped memory for tpu_custom_call.1']
    #allocation7 [shape = 'u8[4096]{0}', space=vmem, size = 0x1000, scoped, tag = 'output window, operand 0, single buffered']
    %8 = vsyncpa [#allocation3], 0
    %9 = vsyncpa [#allocation6], 0
    %10 = vsyncpa [#allocation4], 0
    // Predicated region
    $region2: #{tpu_custom_call.1} parent=1 // pred_check
      _
    $region3: #{tpu_custom_call.1} parent=1 // pred_check_branch
      %12 = sbr.rel (0) target = $region5
    $region4: #{tpu_custom_call.1} parent=1 // pred_region
      %14 = vsyncadd [#allocation3], 0
      %s16 = sshll.u32 %s0, 4
      %s17 = int_to_ptr.hbm [resolvable:$true] %s16
      %s18 = sshll.u32 [#allocation2], 4
      %s19 = int_to_ptr.vmem [resolvable:$true] %s18
      %21 = dma.hbm_to_vmem [thread:$0]  %s17, 896, %s19, [#allocation3]
    $region5: #{tpu_custom_call.1} parent=1 // pred_fallthru
      _
    // Predicated region
    $region6: #{tpu_custom_call.1} parent=1 // pred_check
      _
    $region7: #{tpu_custom_call.1} parent=1 // pred_check_branch
      %23 = sbr.rel (0) target = $region9
    $region8: #{tpu_custom_call.1} parent=1 // pred_region
      %25 = vsyncadd [#allocation6], 0
      %s26 = sshll.u32 %s1, 4
      %s27 = int_to_ptr.hbm [resolvable:$true] %s26
      %s28 = sshll.u32 [#allocation5], 4
      %s29 = int_to_ptr.vmem [resolvable:$true] %s28
      %34 = dma.hbm_to_vmem [thread:$0]  %s27, 1792, %s29, [#allocation6], 896, 896, 56
    $region9: #{tpu_custom_call.1} parent=1 // pred_fallthru
      _
    // Predicated region
    $region10: #{tpu_custom_call.1} parent=1 // pred_check
      _
    $region11: #{tpu_custom_call.1} parent=1 // pred_check_branch
      %36 = sbr.rel (0) target = $region13
    $region12: #{tpu_custom_call.1} parent=1 // pred_region
      _
    $region13: #{tpu_custom_call.1} parent=1 // pred_fallthru
      _
    // Predicated region
    $region14: #{tpu_custom_call.1} parent=1 // pred_check
      _
    $region15: #{tpu_custom_call.1} parent=1 // pred_check_branch
      %38 = sbr.rel (0) target = $region17
    $region16: #{tpu_custom_call.1} parent=1 // pred_region
      %40 = dma.done [#allocation3], 896
    $region17: #{tpu_custom_call.1} parent=1 // pred_fallthru
      _
    // Predicated region
    $region18: #{tpu_custom_call.1} parent=1 // pred_check
      _
    $region19: #{tpu_custom_call.1} parent=1 // pred_check_branch
      %42 = sbr.rel (0) target = $region21
    $region20: #{tpu_custom_call.1} parent=1 // pred_region
      %44 = dma.done [#allocation6], 1792
    $region21: #{tpu_custom_call.1} parent=1 // pred_fallthru
      _
    %v45 = vld [vmem:[#allocation2] sm:$0xff]
    %v46 = vld [vmem:[#allocation2 + $0x8] sm:$0xff]
    %v47 = vld [vmem:[#allocation2 + $0x10] sm:$0xff]
    %v48 = vld [vmem:[#allocation2 + $0x18] sm:$0xff]
    %v49 = vld [vmem:[#allocation2 + $0x20] sm:$0xff]
    %v50 = vld [vmem:[#allocation2 + $0x28] sm:$0xff]
    %v51 = vld [vmem:[#allocation2 + $0x30] sm:$0xff]
    %v52 = vld [vmem:[#allocation5] sm:$0xff]
    %v53 = vld [vmem:[#allocation5 + $0x8] sm:$0xff]
    %v54 = vld [vmem:[#allocation5 + $0x10] sm:$0xff]
    %v55 = vld [vmem:[#allocation5 + $0x18] sm:$0xff]
    %v56 = vld [vmem:[#allocation5 + $0x20] sm:$0xff]
    %v57 = vld [vmem:[#allocation5 + $0x28] sm:$0xff]
    %v58 = vld [vmem:[#allocation5 + $0x30] sm:$0xff]
    %v59 = vld [vmem:[#allocation5 + $0x38] sm:$0x3]
    %v60 = vld [vmem:[#allocation5 + $0x40] sm:$0x3]
    %v61 = vld [vmem:[#allocation5 + $0x48] sm:$0x3]
    %v62 = vld [vmem:[#allocation5 + $0x50] sm:$0x3]
    %v63 = vld [vmem:[#allocation5 + $0x58] sm:$0x3]
    %v64 = vld [vmem:[#allocation5 + $0x60] sm:$0x3]
    %v65 = vld [vmem:[#allocation5 + $0x68] sm:$0x3]
    %v66 = vld [vmem:[%s2] sm:$0x1]
    %v68 = vperm.slane %v66, 0
    %vm70 = vcmask 130048
    %v72 = vsel %vm70, %v51, 0
    %v75 = vsel %vm70, %v58, 0
    %v78 = vsel %vm70, %v65, 0
    %80 = vmatpush.xpose.msra.mxu0 0.0
    %81 = vmatpush.xpose.msra.mxu0 0.0
    %82 = vmatpush.xpose.msra.mxu0 0.0
    %83 = vmatpush.xpose.msra.mxu0 0.0
    %84 = vmatpush.xpose.msra.mxu0 0.0
    %85 = vmatpush.xpose.msra.mxu0 0.0
    %86 = vmatpush.xpose.msra.mxu0 0.0
    %87 = vmatpush.xpose.msra.mxu0 0.0
    %88 = vmatpush.xpose.msra.mxu0 0.0
    %89 = vmatpush.xpose.msra.mxu0 0.0
    %90 = vmatpush.xpose.msra.mxu0 0.0
    %91 = vmatpush.xpose.msra.mxu0 0.0
    %92 = vmatpush.xpose.msra.mxu0 0.0
    %93 = vmatpush.xpose.msra.mxu0 0.0
    %94 = vmatpush.xpose.msra.mxu0 %v59
    %95 = vmatpush.xpose.msra.mxu0 %v52
    %96 = vmatmul.f32.gmra.mxu0 %v45
    %v97 = vpop.f32.mrf.mxu0
    %v98 = vadd.f32 %v68, %v97
    %99 = vdwg.mxu0
    %100 = vmatpush.xpose.msra.mxu0 0.0
    %101 = vmatpush.xpose.msra.mxu0 0.0
    %102 = vmatpush.xpose.msra.mxu0 0.0
    %103 = vmatpush.xpose.msra.mxu0 0.0
    %104 = vmatpush.xpose.msra.mxu0 0.0
    %105 = vmatpush.xpose.msra.mxu0 0.0
    %106 = vmatpush.xpose.msra.mxu0 0.0
    %107 = vmatpush.xpose.msra.mxu0 0.0
    %108 = vmatpush.xpose.msra.mxu0 0.0
    %109 = vmatpush.xpose.msra.mxu0 0.0
    %110 = vmatpush.xpose.msra.mxu0 0.0
    %111 = vmatpush.xpose.msra.mxu0 0.0
    %112 = vmatpush.xpose.msra.mxu0 0.0
    %113 = vmatpush.xpose.msra.mxu0 0.0
    %114 = vmatpush.xpose.msra.mxu0 %v60
    %115 = vmatpush.xpose.msra.mxu0 %v53
    %116 = vmatmul.f32.gmra.mxu0 %v46
    %v117 = vpop.f32.mrf.mxu0
    %v118 = vadd.f32 %v98, %v117
    %119 = vdwg.mxu0
    %120 = vmatpush.xpose.msra.mxu0 0.0
    %121 = vmatpush.xpose.msra.mxu0 0.0
    %122 = vmatpush.xpose.msra.mxu0 0.0
    %123 = vmatpush.xpose.msra.mxu0 0.0
    %124 = vmatpush.xpose.msra.mxu0 0.0
    %125 = vmatpush.xpose.msra.mxu0 0.0
    %126 = vmatpush.xpose.msra.mxu0 0.0
    %127 = vmatpush.xpose.msra.mxu0 0.0
    %128 = vmatpush.xpose.msra.mxu0 0.0
    %129 = vmatpush.xpose.msra.mxu0 0.0
    %130 = vmatpush.xpose.msra.mxu0 0.0
    %131 = vmatpush.xpose.msra.mxu0 0.0
    %132 = vmatpush.xpose.msra.mxu0 0.0
    %133 = vmatpush.xpose.msra.mxu0 0.0
    %134 = vmatpush.xpose.msra.mxu0 %v61
    %135 = vmatpush.xpose.msra.mxu0 %v54
    %136 = vmatmul.f32.gmra.mxu0 %v47
    %v137 = vpop.f32.mrf.mxu0
    %v138 = vadd.f32 %v118, %v137
    %139 = vdwg.mxu0
    %140 = vmatpush.xpose.msra.mxu0 0.0
    %141 = vmatpush.xpose.msra.mxu0 0.0
    %142 = vmatpush.xpose.msra.mxu0 0.0
    %143 = vmatpush.xpose.msra.mxu0 0.0
    %144 = vmatpush.xpose.msra.mxu0 0.0
    %145 = vmatpush.xpose.msra.mxu0 0.0
    %146 = vmatpush.xpose.msra.mxu0 0.0
    %147 = vmatpush.xpose.msra.mxu0 0.0
    %148 = vmatpush.xpose.msra.mxu0 0.0
    %149 = vmatpush.xpose.msra.mxu0 0.0
    %150 = vmatpush.xpose.msra.mxu0 0.0
    %151 = vmatpush.xpose.msra.mxu0 0.0
    %152 = vmatpush.xpose.msra.mxu0 0.0
    %153 = vmatpush.xpose.msra.mxu0 0.0
    %154 = vmatpush.xpose.msra.mxu0 %v62
    %155 = vmatpush.xpose.msra.mxu0 %v55
    %156 = vmatmul.f32.gmra.mxu0 %v48
    %v157 = vpop.f32.mrf.mxu0
    %v158 = vadd.f32 %v138, %v157
    %159 = vdwg.mxu0
    %160 = vmatpush.xpose.msra.mxu0 0.0
    %161 = vmatpush.xpose.msra.mxu0 0.0
    %162 = vmatpush.xpose.msra.mxu0 0.0
    %163 = vmatpush.xpose.msra.mxu0 0.0
    %164 = vmatpush.xpose.msra.mxu0 0.0
    %165 = vmatpush.xpose.msra.mxu0 0.0
    %166 = vmatpush.xpose.msra.mxu0 0.0
    %167 = vmatpush.xpose.msra.mxu0 0.0
    %168 = vmatpush.xpose.msra.mxu0 0.0
    %169 = vmatpush.xpose.msra.mxu0 0.0
    %170 = vmatpush.xpose.msra.mxu0 0.0
    %171 = vmatpush.xpose.msra.mxu0 0.0
    %172 = vmatpush.xpose.msra.mxu0 0.0
    %173 = vmatpush.xpose.msra.mxu0 0.0
    %174 = vmatpush.xpose.msra.mxu0 %v63
    %175 = vmatpush.xpose.msra.mxu0 %v56
    %176 = vmatmul.f32.gmra.mxu0 %v49
    %v177 = vpop.f32.mrf.mxu0
    %v178 = vadd.f32 %v158, %v177
    %179 = vdwg.mxu0
    %180 = vmatpush.xpose.msra.mxu0 0.0
    %181 = vmatpush.xpose.msra.mxu0 0.0
    %182 = vmatpush.xpose.msra.mxu0 0.0
    %183 = vmatpush.xpose.msra.mxu0 0.0
    %184 = vmatpush.xpose.msra.mxu0 0.0
    %185 = vmatpush.xpose.msra.mxu0 0.0
    %186 = vmatpush.xpose.msra.mxu0 0.0
    %187 = vmatpush.xpose.msra.mxu0 0.0
    %188 = vmatpush.xpose.msra.mxu0 0.0
    %189 = vmatpush.xpose.msra.mxu0 0.0
    %190 = vmatpush.xpose.msra.mxu0 0.0
    %191 = vmatpush.xpose.msra.mxu0 0.0
    %192 = vmatpush.xpose.msra.mxu0 0.0
    %193 = vmatpush.xpose.msra.mxu0 0.0
    %194 = vmatpush.xpose.msra.mxu0 %v64
    %195 = vmatpush.xpose.msra.mxu0 %v57
    %196 = vmatmul.f32.gmra.mxu0 %v50
    %v197 = vpop.f32.mrf.mxu0
    %v198 = vadd.f32 %v178, %v197
    %199 = vdwg.mxu0
    %200 = vmatpush.xpose.msra.mxu0 0.0
    %201 = vmatpush.xpose.msra.mxu0 0.0
    %202 = vmatpush.xpose.msra.mxu0 0.0
    %203 = vmatpush.xpose.msra.mxu0 0.0
    %204 = vmatpush.xpose.msra.mxu0 0.0
    %205 = vmatpush.xpose.msra.mxu0 0.0
    %206 = vmatpush.xpose.msra.mxu0 0.0
    %207 = vmatpush.xpose.msra.mxu0 0.0
    %208 = vmatpush.xpose.msra.mxu0 0.0
    %209 = vmatpush.xpose.msra.mxu0 0.0
    %210 = vmatpush.xpose.msra.mxu0 0.0
    %211 = vmatpush.xpose.msra.mxu0 0.0
    %212 = vmatpush.xpose.msra.mxu0 0.0
    %213 = vmatpush.xpose.msra.mxu0 0.0
    %214 = vmatpush.xpose.msra.mxu0 %v78
    %215 = vmatpush.xpose.msra.mxu0 %v75
    %216 = vmatmul.f32.gmra.mxu0 %v72
    %v217 = vpop.f32.mrf.mxu0
    %v218 = vadd.f32 %v198, %v217
    %219 = vdwg.mxu0
    %vm220 = vcmask 80896
    %221 = vst.msk [vmem:[#allocation7] sm:$0xff] %vm220, %v218
    // Predicated region
    $region22: #{tpu_custom_call.1} parent=1 // pred_check
      _
    $region23: #{tpu_custom_call.1} parent=1 // pred_check_branch
      %223 = sbr.rel (0) target = $region25
    $region24: #{tpu_custom_call.1} parent=1 // pred_region
      %225 = vsyncadd [#allocation4], 0
      %s227 = sshll.u32 [#allocation7], 4
      %s228 = int_to_ptr.vmem [resolvable:$true] %s227
      %s229 = sshll.u32 %s3, 4
      %s230 = int_to_ptr.hbm [resolvable:$true] %s229
      %232 = dma.vmem_to_hbm [thread:$0]  %s228, 128, %s230, [#allocation4]
    $region25: #{tpu_custom_call.1} parent=1 // pred_fallthru
      _
    // Predicated region
    $region26: #{tpu_custom_call.1} parent=1 // pred_check
      _
    $region27: #{tpu_custom_call.1} parent=1 // pred_check_branch
      %234 = sbr.rel (0) target = $region29
    $region28: #{tpu_custom_call.1} parent=1 // pred_region
      %236 = dma.done [#allocation4], 128
    $region29: #{tpu_custom_call.1} parent=1 // pred_fallthru
      _
    %237 = vsyncpa [#allocation3], 1
    %238 = vsyncpa [#allocation6], 1
    %239 = vsyncpa [#allocation4], 1

</llo_original>
